<compile_context>
chip_gen: v6e
topology: v6e:2x2x1
jax: 0.10.0
libtpu: 0.0.40
codegen_flags: <defaults>
</compile_context>

<pallas_src>
import jax
import jax.numpy as jnp
from jax import lax
from jax.experimental import pallas as pl
from jax.experimental.pallas import tpu as pltpu


def _embed_kernel(ids_ref, table_ref, out_ref):
    # ids_ref:   SMEM (B,)           int32  -- class indices
    # table_ref: VMEM (n_classes, D)        -- whole table, DMA'd once
    # out_ref:   VMEM (B, D)
    n_classes = table_ref.shape[0]
    batch = out_ref.shape[0]

    def body(i, carry):
        # Clamp defensively: an out-of-range id would otherwise read garbage
        # VMEM (nn.Embedding would raise in PyTorch).
        idx = jnp.clip(ids_ref[i], 0, n_classes - 1)
        out_ref[pl.ds(i, 1), :] = table_ref[pl.ds(idx, 1), :]
        return carry

    lax.fori_loop(0, batch, body, 0, unroll=True)


def class_embedder_forward(class_ids: jax.Array, emb_table: jax.Array) -> jax.Array:
    """class_ids: (B,) integer; emb_table: (n_classes, D) -> (B, 1, D)."""
    batch = class_ids.shape[0]
    n_classes, dim = emb_table.shape

    table_bytes = n_classes * dim * emb_table.dtype.itemsize
    if table_bytes > 48 * 1024 * 1024:
        # TODO(synk): for tables too large for VMEM, use a manual
        # double-buffered DMA gather (P4) instead; XLA gather fallback here.
        return jnp.take(emb_table, class_ids.astype(jnp.int32), axis=0)[:, None, :]

    # Budget: resident table + output block + headroom; within v7x's 64 MiB.
    needed = table_bytes + 2 * batch * dim * emb_table.dtype.itemsize + (1 << 20)
    vmem_limit = int(min(64 * 1024 * 1024, max(needed, 16 * 1024 * 1024)))

    out2d = pl.pallas_call(
        _embed_kernel,
        out_shape=jax.ShapeDtypeStruct((batch, dim), emb_table.dtype),
        in_specs=[
            pl.BlockSpec(memory_space=pltpu.MemorySpace.SMEM),   # ids
            pl.BlockSpec(memory_space=pltpu.MemorySpace.VMEM),   # resident table
        ],
        out_specs=pl.BlockSpec(memory_space=pltpu.MemorySpace.VMEM),
        compiler_params=pltpu.CompilerParams(vmem_limit_bytes=vmem_limit),
    )(class_ids.astype(jnp.int32), emb_table)

    # (B, D) -> (B, 1, D): free metadata reshape outside the kernel.
    return out2d[:, None, :]


class ClassEmbedder:
    """JAX/Pallas mirror of the PyTorch ClassEmbedder."""

    def __init__(self, embed_dim, n_classes=1000, key='class', rng=None):
        self.key = key
        if rng is None:
            rng = jax.random.PRNGKey(0)
        # nn.Embedding default init ~ N(0, 1); deterministic synthetic weights.
        self.embedding_weight = jax.random.normal(
            rng, (n_classes, embed_dim), dtype=jnp.float32
        )

    def forward(self, batch, key=None):
        if key is None:
            key = self.key
        c = batch[key]                                            # (B,) class ids
        return class_embedder_forward(c, self.embedding_weight)  # (B, 1, D)


if __name__ == "__main__":
    rng = jax.random.PRNGKey(0)
    k_emb, k_ids = jax.random.split(rng)

    embed_dim = 128
    n_classes = 16
    batch_size = 4

    embedder = ClassEmbedder(embed_dim, n_classes=n_classes, key='class', rng=k_emb)

    class_ids = jax.random.randint(k_ids, (batch_size,), 0, n_classes, dtype=jnp.int32)
    batch = {'class': class_ids}

    out = embedder.forward(batch)
    out = jax.block_until_ready(out)

    # Reference check against plain JAX gather.
    ref = jnp.take(embedder.embedding_weight, class_ids, axis=0)[:, None, :]
    assert out.shape == (batch_size, 1, embed_dim), out.shape
    assert jnp.allclose(out, ref), "Pallas embedding lookup mismatch"

    print("KERNEL_OK")
</pallas_src>

<mosaic_0001>
module attributes {stable_mosaic.version = 11 : i64} {
  func.func @_embed_kernel(%arg0: memref<4xi32, #tpu.memory_space<smem>>, %arg1: memref<16x128xf32, #tpu.memory_space<vmem>>, %arg2: memref<4x128xf32, #tpu.memory_space<vmem>>) attributes {dimension_semantics = [], scalar_prefetch = 0 : i64, scratch_operands = 0 : i64, tpu.core_type = #tpu.core_type<tc>} {
    %c0_i32 = arith.constant 0 : i32
    %0 = arith.index_cast %c0_i32 : i32 to index
    %1 = memref.load %arg0[%0] : memref<4xi32, #tpu.memory_space<smem>>
    %c0_i32_0 = arith.constant 0 : i32
    %c15_i32 = arith.constant 15 : i32
    %2 = arith.maxsi %c0_i32_0, %1 : i32
    %3 = arith.minsi %c15_i32, %2 : i32
    %4 = arith.index_cast %3 : i32 to index
    %c0 = arith.constant 0 : index
    %5 = vector.load %arg1[%4, %c0] : memref<16x128xf32, #tpu.memory_space<vmem>>, vector<1x128xf32>
    %6 = arith.index_cast %c0_i32 : i32 to index
    %c0_1 = arith.constant 0 : index
    %7 = vector.load %arg2[%6, %c0_1] : memref<4x128xf32, #tpu.memory_space<vmem>>, vector<1x128xf32>
    tpu.vector_store %arg2[%6, %c0_1], %5 {strides = array<i32>} : memref<4x128xf32, #tpu.memory_space<vmem>>, vector<1x128xf32>,
    %c1_i32 = arith.constant 1 : i32
    %8 = arith.index_cast %c1_i32 : i32 to index
    %9 = memref.load %arg0[%8] : memref<4xi32, #tpu.memory_space<smem>>
    %c0_i32_2 = arith.constant 0 : i32
    %c15_i32_3 = arith.constant 15 : i32
    %10 = arith.maxsi %c0_i32_2, %9 : i32
    %11 = arith.minsi %c15_i32_3, %10 : i32
    %12 = arith.index_cast %11 : i32 to index
    %c0_4 = arith.constant 0 : index
    %13 = vector.load %arg1[%12, %c0_4] : memref<16x128xf32, #tpu.memory_space<vmem>>, vector<1x128xf32>
    %14 = arith.index_cast %c1_i32 : i32 to index
    %c0_5 = arith.constant 0 : index
    %15 = vector.load %arg2[%14, %c0_5] : memref<4x128xf32, #tpu.memory_space<vmem>>, vector<1x128xf32>
    tpu.vector_store %arg2[%14, %c0_5], %13 {strides = array<i32>} : memref<4x128xf32, #tpu.memory_space<vmem>>, vector<1x128xf32>,
    %c2_i32 = arith.constant 2 : i32
    %16 = arith.index_cast %c2_i32 : i32 to index
    %17 = memref.load %arg0[%16] : memref<4xi32, #tpu.memory_space<smem>>
    %c0_i32_6 = arith.constant 0 : i32
    %c15_i32_7 = arith.constant 15 : i32
    %18 = arith.maxsi %c0_i32_6, %17 : i32
    %19 = arith.minsi %c15_i32_7, %18 : i32
    %20 = arith.index_cast %19 : i32 to index
    %c0_8 = arith.constant 0 : index
    %21 = vector.load %arg1[%20, %c0_8] : memref<16x128xf32, #tpu.memory_space<vmem>>, vector<1x128xf32>
    %22 = arith.index_cast %c2_i32 : i32 to index
    %c0_9 = arith.constant 0 : index
    %23 = vector.load %arg2[%22, %c0_9] : memref<4x128xf32, #tpu.memory_space<vmem>>, vector<1x128xf32>
    tpu.vector_store %arg2[%22, %c0_9], %21 {strides = array<i32>} : memref<4x128xf32, #tpu.memory_space<vmem>>, vector<1x128xf32>,
    %c3_i32 = arith.constant 3 : i32
    %24 = arith.index_cast %c3_i32 : i32 to index
    %25 = memref.load %arg0[%24] : memref<4xi32, #tpu.memory_space<smem>>
    %c0_i32_10 = arith.constant 0 : i32
    %c15_i32_11 = arith.constant 15 : i32
    %26 = arith.maxsi %c0_i32_10, %25 : i32
    %27 = arith.minsi %c15_i32_11, %26 : i32
    %28 = arith.index_cast %27 : i32 to index
    %c0_12 = arith.constant 0 : index
    %29 = vector.load %arg1[%28, %c0_12] : memref<16x128xf32, #tpu.memory_space<vmem>>, vector<1x128xf32>
    %30 = arith.index_cast %c3_i32 : i32 to index
    %c0_13 = arith.constant 0 : index
    %31 = vector.load %arg2[%30, %c0_13] : memref<4x128xf32, #tpu.memory_space<vmem>>, vector<1x128xf32>
    tpu.vector_store %arg2[%30, %c0_13], %29 {strides = array<i32>} : memref<4x128xf32, #tpu.memory_space<vmem>>, vector<1x128xf32>,
    %c4_i32 = arith.constant 4 : i32
    return
  }
}

</mosaic_0001>

<llo_original>
// kernel: tpu_custom_call.1
$region0: #{tpu_custom_call.1}
  #allocation0 [shape = 'u32[]', space=smem, size = 0x4, offset = 0x4, fixed_abs, tag = 'smem constant byte address 0x4 - core index']
  #allocation1 [shape = 'u32[144,128]{1,0:T(1,128)}', space=vmem, size = 0x12000, scoped, tag = 'internal scratch']
  %s0 = inlined_call_operand.hbm [shape: s32[4], index: 0, kind: input, shape index: {}]
  %s1 = inlined_call_operand.hbm [shape: f32[16,128], index: 1, kind: input, shape index: {}]
  %s2 = inlined_call_operand.hbm [shape: f32[4,128], index: 2, kind: output, shape index: {}]
  %s3 = sld [smem:[#allocation0]]
  $region26: #{tpu_custom_call.1} parent=0
    _
  %s5 = ssub.s32 1, %s3
  %s6 = scalar_select 0, %s5, %s3
  $region1: #{tpu_custom_call.1} parent=0
    #allocation2 [shape = 'u8[512]{0}', space=smem, size = 0x200, scoped, tag = 'input window, operand 0, single buffered']
    #allocation3 [shape = 's32[1]{0}', space=sflag, size = 0x4, scoped, tag = 'scoped memory for tpu_custom_call.1']
    #allocation4 [shape = 's32[1]{0}', space=sflag, size = 0x4, scoped, tag = 'scoped memory for tpu_custom_call.1']
    #allocation5 [shape = 's32[1]{0}', space=sflag, size = 0x4, scoped, tag = 'scoped memory for tpu_custom_call.1']
    #allocation6 [shape = 'u8[8192]{0}', space=vmem, size = 0x2000, scoped, tag = 'input window, operand 1, single buffered']
    #allocation7 [shape = 'u8[2048]{0}', space=vmem, size = 0x800, scoped, tag = 'output window, operand 0, single buffered']
    %7 = vsyncpa [#allocation5], 0
    %8 = vsyncpa [#allocation3], 0
    %9 = vsyncpa [#allocation4], 0
    // Predicated region
    $region2: #{tpu_custom_call.1} parent=1 // pred_check
      _
    $region3: #{tpu_custom_call.1} parent=1 // pred_check_branch
      %11 = sbr.rel (0) target = $region5
    $region4: #{tpu_custom_call.1} parent=1 // pred_region
      %s13 = ssub.s32 16, 16
      %14 = vsyncadd [#allocation5], %s13
      %17 = dma.hbm_to_smem %s0, 16, [#allocation2], [#allocation5]
    $region5: #{tpu_custom_call.1} parent=1 // pred_fallthru
      _
    // Predicated region
    $region6: #{tpu_custom_call.1} parent=1 // pred_check
      _
    $region7: #{tpu_custom_call.1} parent=1 // pred_check_branch
      %19 = sbr.rel (0) target = $region9
    $region8: #{tpu_custom_call.1} parent=1 // pred_region
      %s21 = ssub.s32 256, 256
      %22 = vsyncadd [#allocation3], %s21
      %s23 = sshll.u32 [#allocation6], 4
      %s24 = int_to_ptr.vmem [resolvable:$true] %s23
      %29 = dma.hbm_to_vmem [thread:$0]  %s1, 256, %s24, [#allocation3], 128, 128, 8
    $region9: #{tpu_custom_call.1} parent=1 // pred_fallthru
      _
    // Predicated region
    $region10: #{tpu_custom_call.1} parent=1 // pred_check
      _
    $region11: #{tpu_custom_call.1} parent=1 // pred_check_branch
      %31 = sbr.rel (0) target = $region13
    $region12: #{tpu_custom_call.1} parent=1 // pred_region
      %32 = dma.done [#allocation5], 16
    $region13: #{tpu_custom_call.1} parent=1 // pred_fallthru
      _
    // Predicated region
    $region14: #{tpu_custom_call.1} parent=1 // pred_check
      _
    $region15: #{tpu_custom_call.1} parent=1 // pred_check_branch
      %34 = sbr.rel (0) target = $region17
    $region16: #{tpu_custom_call.1} parent=1 // pred_region
      %35 = dma.done [#allocation3], 256
    $region17: #{tpu_custom_call.1} parent=1 // pred_fallthru
      _
    %36 = sfence
    %s37 = sld [smem:[#allocation2]]
    %p38 = scmp.gt.s32.totalorder %s37, 0
    %s39 = scalar_select %p38, %s37, 0
    %p40 = scmp.lt.s32.totalorder %s39, 15
    %s41 = scalar_select %p40, %s39, 15
    %s42 = scalar_lea.vmem [#allocation6], %s41
    %v43 = vld [vmem:[%s42] sm:$0x1]
    %44 = vst [vmem:[#allocation7] sm:$0x1] %v43
    %s45 = sld [smem:[#allocation2 + $0x1]]
    %p46 = scmp.gt.s32.totalorder %s45, 0
    %s47 = scalar_select %p46, %s45, 0
    %p48 = scmp.lt.s32.totalorder %s47, 15
    %s49 = scalar_select %p48, %s47, 15
    %s50 = scalar_lea.vmem [#allocation6], %s49
    %v51 = vld [vmem:[%s50] sm:$0x1]
    %52 = vst [vmem:[#allocation7 + $0x1] sm:$0x1] %v51
    %s53 = sld [smem:[#allocation2 + $0x2]]
    %p54 = scmp.gt.s32.totalorder %s53, 0
    %s55 = scalar_select %p54, %s53, 0
    %p56 = scmp.lt.s32.totalorder %s55, 15
    %s57 = scalar_select %p56, %s55, 15
    %s58 = scalar_lea.vmem [#allocation6], %s57
    %v59 = vld [vmem:[%s58] sm:$0x1]
    %60 = vst [vmem:[#allocation7 + $0x2] sm:$0x1] %v59
    %s61 = sld [smem:[#allocation2 + $0x3]]
    %p62 = scmp.gt.s32.totalorder %s61, 0
    %s63 = scalar_select %p62, %s61, 0
    %p64 = scmp.lt.s32.totalorder %s63, 15
    %s65 = scalar_select %p64, %s63, 15
    %s66 = scalar_lea.vmem [#allocation6], %s65
    %v67 = vld [vmem:[%s66] sm:$0x1]
    %68 = vst [vmem:[#allocation7 + $0x3] sm:$0x1] %v67
    // Predicated region
    $region18: #{tpu_custom_call.1} parent=1 // pred_check
      _
    $region19: #{tpu_custom_call.1} parent=1 // pred_check_branch
      %70 = sbr.rel (0) target = $region21
    $region20: #{tpu_custom_call.1} parent=1 // pred_region
      %s72 = ssub.s32 64, 64
      %73 = vsyncadd [#allocation4], %s72
      %s75 = sshll.u32 [#allocation7], 4
      %s76 = int_to_ptr.vmem [resolvable:$true] %s75
      %78 = dma.vmem_to_hbm [thread:$0]  %s76, 64, %s2, [#allocation4]
    $region21: #{tpu_custom_call.1} parent=1 // pred_fallthru
      _
    // Predicated region
    $region22: #{tpu_custom_call.1} parent=1 // pred_check
      _
    $region23: #{tpu_custom_call.1} parent=1 // pred_check_branch
      %80 = sbr.rel (0) target = $region25
    $region24: #{tpu_custom_call.1} parent=1 // pred_region
      %81 = dma.done [#allocation4], 64
    $region25: #{tpu_custom_call.1} parent=1 // pred_fallthru
      _
    %82 = vsyncpa [#allocation3], 1
    %83 = vsyncpa [#allocation4], 1
    %84 = vsyncpa [#allocation5], 1

</llo_original>
